<compile_context>
chip_gen: v7x
topology: tpu7x:2x2x1
jax: 0.10.0
libtpu: 0.0.40
codegen_flags: <defaults>
</compile_context>

<pallas_src>
import numpy as np
import jax
import jax.numpy as jnp
from jax.experimental import pallas as pl
from jax.experimental.pallas import tpu as pltpu


def get_frequency_modes(seq_len, modes=64, mode_select_method='random'):
    modes = min(modes, seq_len // 2)
    if mode_select_method == 'random':
        index = list(range(0, seq_len // 2))
        np.random.shuffle(index)
        index = index[:modes]
    else:
        index = list(range(0, modes))
    index.sort()
    return index


# ---------------- Pallas kernel: complex mode mixing ----------------
# For a group of Hg heads (one grid step):
#   out[h, b, o, m] = sum_e x[h, b, e, m] * W[h, e, o, m]          (complex)
# Real/imag are packed on the leading axis (index 0 = real, 1 = imag).
def _spectral_mix_kernel(x_ref, w_ref, o_ref):
    # block shapes:
    #   x_ref : (2, Hg, B,  E,  Mp)   selected rfft coefficients (re/im packed)
    #   w_ref : (2, Hg, E,  Eo, Mp)   complex weights (re/im packed)
    #   o_ref : (2, Hg, B,  Eo, Mp)   mixed output coefficients
    xr = x_ref[0][:, :, :, None, :]          # (Hg, B, E, 1,  Mp)
    xi = x_ref[1][:, :, :, None, :]
    wr = w_ref[0][:, None, :, :, :]          # (Hg, 1, E, Eo, Mp)
    wi = w_ref[1][:, None, :, :, :]

    # Gauss / Karatsuba 3-multiply complex product, fused reduction over E (axis=2).
    s = xr + xi                              # (Hg, B, E, 1,  Mp)
    d = wi - wr                              # (Hg, 1, E, Eo, Mp)
    t = wr + wi                              # (Hg, 1, E, Eo, Mp)
    k1 = jnp.sum(wr * s, axis=2)             # (Hg, B, Eo, Mp)
    k2 = jnp.sum(xr * d, axis=2)
    k3 = jnp.sum(xi * t, axis=2)

    o_ref[0] = k1 - k3                       # real part
    o_ref[1] = k1 + k2                       # imag part


def spectral_mix(xpk, wpk):
    """xpk: (2, H, B, E, Mp) f32 ; wpk: (2, H, E, Eo, Mp) f32
       -> (2, H, B, Eo, Mp) f32 (re/im packed)."""
    _, H, B, E, Mp = xpk.shape
    Eo = wpk.shape[3]
    # 2 head-groups keep >=2 parallel grid steps for v7x megacore; single group fallback.
    G = 2 if H % 2 == 0 else 1
    Hg = H // G

    x_spec = pl.BlockSpec((2, Hg, B, E, Mp), lambda g: (0, g, 0, 0, 0))
    w_spec = pl.BlockSpec((2, Hg, E, Eo, Mp), lambda g: (0, g, 0, 0, 0))
    o_spec = pl.BlockSpec((2, Hg, B, Eo, Mp), lambda g: (0, g, 0, 0, 0))

    return pl.pallas_call(
        _spectral_mix_kernel,
        out_shape=jax.ShapeDtypeStruct((2, H, B, Eo, Mp), jnp.float32),
        grid=(G,),
        in_specs=[x_spec, w_spec],
        out_specs=o_spec,
        compiler_params=pltpu.CompilerParams(dimension_semantics=("parallel",)),
    )(xpk, wpk)


# ---------------- Forward pass (FFT glue in JAX, mixing in Pallas) ----------------
def spectral_conv1d_forward(q, weights_r, weights_i, index):
    """q: (B, L, H, E); weights_*: (8, E, Eo, modes1) real/imag parts.
       Returns (x, None) with x: (B, H, Eo, L), matching the PyTorch module."""
    B, L, H, E = q.shape
    M = len(index)
    Eo = weights_r.shape[2]
    Mp = ((M + 127) // 128) * 128            # lane-dense modes axis (multiple of 128)

    x = jnp.transpose(q, (0, 2, 3, 1)).astype(jnp.float32)      # (B, H, E, L)
    x_ft = jnp.fft.rfft(x, axis=-1)                             # (B, H, E, L//2+1) c64
    idx = jnp.asarray(index, dtype=jnp.int32)
    x_sel = jnp.take(x_ft, idx, axis=-1)                        # (B, H, E, M)

    # pack real/imag + reorder to (2, H, B, E, M), then pad modes to Mp
    xpk = jnp.stack([jnp.real(x_sel), jnp.imag(x_sel)], axis=0)        # (2, B, H, E, M)
    xpk = jnp.transpose(xpk, (0, 2, 1, 3, 4)).astype(jnp.float32)      # (2, H, B, E, M)
    xpk = jnp.pad(xpk, ((0, 0),) * 4 + ((0, Mp - M),))

    wpk = jnp.stack([weights_r[..., :M], weights_i[..., :M]], axis=0)  # (2, H, E, Eo, M)
    wpk = jnp.pad(wpk.astype(jnp.float32), ((0, 0),) * 4 + ((0, Mp - M),))

    out_pk = spectral_mix(xpk, wpk)                             # (2, H, B, Eo, Mp)

    out_c = (out_pk[0, ..., :M] + 1j * out_pk[1, ..., :M]).astype(jnp.complex64)  # (H,B,Eo,M)
    out_c = jnp.transpose(out_c, (1, 0, 2, 3))                  # (B, H, Eo, M)

    # NOTE: like the original PyTorch/FEDformer code, the mixed coefficients are written
    # at positions 0..M-1 (the loop index wi), NOT at the selected frequency indices.
    out_ft = jnp.zeros((B, H, Eo, L // 2 + 1), jnp.complex64)
    out_ft = out_ft.at[..., :M].set(out_c)
    x_out = jnp.fft.irfft(out_ft, n=L, axis=-1)                 # (B, H, Eo, L)
    return x_out, None


# ---------------- pure-JAX reference (mirrors the torch code) ----------------
def reference_forward(q, weights_r, weights_i, index):
    B, L, H, E = q.shape
    Eo = weights_r.shape[2]
    w = (weights_r + 1j * weights_i).astype(jnp.complex64)
    x = jnp.transpose(q, (0, 2, 3, 1)).astype(jnp.float32)
    x_ft = jnp.fft.rfft(x, axis=-1)
    out_ft = jnp.zeros((B, H, Eo, L // 2 + 1), jnp.complex64)
    for wi_, i in enumerate(index):
        mixed = jnp.einsum('bhi,hio->bho', x_ft[:, :, :, i], w[:, :, :, wi_])
        out_ft = out_ft.at[:, :, :, wi_].set(mixed)
    return jnp.fft.irfft(out_ft, n=L, axis=-1)


if __name__ == "__main__":
    # Module config implied by forward: H must be 8, E = in_channels // 8,
    # Eo = out_channels // 8 must equal E.
    in_channels = 32
    out_channels = 32
    seq_len = 16
    modes = 8
    B, L, H, E = 2, seq_len, 8, in_channels // 8
    Eo = out_channels // 8

    index = get_frequency_modes(seq_len, modes=modes, mode_select_method='list')
    modes1 = modes
    scale = 1.0 / (in_channels * out_channels)

    key = jax.random.PRNGKey(0)
    k_q, k_wr, k_wi = jax.random.split(key, 3)
    q = jax.random.normal(k_q, (B, L, H, E), dtype=jnp.float32)
    # weights1 = scale * rand(8, in//8, out//8, modes1, cfloat) -> real/imag parts
    weights_r = scale * jax.random.uniform(
        k_wr, (8, in_channels // 8, out_channels // 8, modes1), dtype=jnp.float32)
    weights_i = scale * jax.random.uniform(
        k_wi, (8, in_channels // 8, out_channels // 8, modes1), dtype=jnp.float32)

    out, _ = spectral_conv1d_forward(q, weights_r, weights_i, index)
    out = jax.block_until_ready(out)

    ref = jax.block_until_ready(reference_forward(q, weights_r, weights_i, index))
    assert out.shape == (B, H, Eo, L), out.shape
    assert jnp.allclose(out, ref, atol=1e-5, rtol=1e-5), float(jnp.max(jnp.abs(out - ref)))

    print("KERNEL_OK")
</pallas_src>

<mosaic_0001>
module attributes {stable_mosaic.version = 11 : i64} {
  func.func @_spectral_mix_kernel(%arg0: i32, %arg1: memref<2x4x2x4x128xf32, #tpu.memory_space<vmem>>, %arg2: memref<2x4x4x4x128xf32, #tpu.memory_space<vmem>>, %arg3: memref<2x4x2x4x128xf32, #tpu.memory_space<vmem>>) attributes {dimension_semantics = [#tpu.dimension_semantics<parallel>], iteration_bounds = array<i64: 2>, scalar_prefetch = 0 : i64, scratch_operands = 0 : i64, tpu.core_type = #tpu.core_type<tc>, window_params = [{transform_indices = @transform_0, window_bounds = array<i64: 2, 4, 2, 4, 128>}, {transform_indices = @transform_1, window_bounds = array<i64: 2, 4, 4, 4, 128>}, {transform_indices = @transform_2, window_bounds = array<i64: 2, 4, 2, 4, 128>}]} {
    %c0 = arith.constant 0 : index
    %c0_0 = arith.constant 0 : index
    %c0_1 = arith.constant 0 : index
    %c0_2 = arith.constant 0 : index
    %c0_3 = arith.constant 0 : index
    %0 = vector.load %arg1[%c0, %c0_0, %c0_1, %c0_2, %c0_3] : memref<2x4x2x4x128xf32, #tpu.memory_space<vmem>>, vector<1x4x2x4x128xf32>
    %1 = vector.shape_cast %0 : vector<1x4x2x4x128xf32> to vector<4x2x4x128xf32>
    %2 = vector.shape_cast %1 : vector<4x2x4x128xf32> to vector<4x2x4x1x128xf32>
    %c1 = arith.constant 1 : index
    %c0_4 = arith.constant 0 : index
    %c0_5 = arith.constant 0 : index
    %c0_6 = arith.constant 0 : index
    %c0_7 = arith.constant 0 : index
    %3 = vector.load %arg1[%c1, %c0_4, %c0_5, %c0_6, %c0_7] : memref<2x4x2x4x128xf32, #tpu.memory_space<vmem>>, vector<1x4x2x4x128xf32>
    %4 = vector.shape_cast %3 : vector<1x4x2x4x128xf32> to vector<4x2x4x128xf32>
    %5 = vector.shape_cast %4 : vector<4x2x4x128xf32> to vector<4x2x4x1x128xf32>
    %c0_8 = arith.constant 0 : index
    %c0_9 = arith.constant 0 : index
    %c0_10 = arith.constant 0 : index
    %c0_11 = arith.constant 0 : index
    %c0_12 = arith.constant 0 : index
    %6 = vector.load %arg2[%c0_8, %c0_9, %c0_10, %c0_11, %c0_12] : memref<2x4x4x4x128xf32, #tpu.memory_space<vmem>>, vector<1x4x4x4x128xf32>
    %7 = vector.shape_cast %6 : vector<1x4x4x4x128xf32> to vector<4x4x4x128xf32>
    %8 = vector.shape_cast %7 : vector<4x4x4x128xf32> to vector<4x1x4x4x128xf32>
    %c1_13 = arith.constant 1 : index
    %c0_14 = arith.constant 0 : index
    %c0_15 = arith.constant 0 : index
    %c0_16 = arith.constant 0 : index
    %c0_17 = arith.constant 0 : index
    %9 = vector.load %arg2[%c1_13, %c0_14, %c0_15, %c0_16, %c0_17] : memref<2x4x4x4x128xf32, #tpu.memory_space<vmem>>, vector<1x4x4x4x128xf32>
    %10 = vector.shape_cast %9 : vector<1x4x4x4x128xf32> to vector<4x4x4x128xf32>
    %11 = vector.shape_cast %10 : vector<4x4x4x128xf32> to vector<4x1x4x4x128xf32>
    %12 = arith.addf %2, %5 : vector<4x2x4x1x128xf32>
    %13 = arith.subf %11, %8 : vector<4x1x4x4x128xf32>
    %14 = arith.addf %8, %11 : vector<4x1x4x4x128xf32>
    %15 = vector.broadcast %8 : vector<4x1x4x4x128xf32> to vector<4x2x4x4x128xf32>
    %16 = vector.broadcast %12 : vector<4x2x4x1x128xf32> to vector<4x2x4x4x128xf32>
    %17 = arith.mulf %15, %16 : vector<4x2x4x4x128xf32>
    %cst = arith.constant dense<0.000000e+00> : vector<4x2x4x128xf32>
    %18 = vector.multi_reduction <add>, %17, %cst [2] : vector<4x2x4x4x128xf32> to vector<4x2x4x128xf32>
    %19 = vector.broadcast %2 : vector<4x2x4x1x128xf32> to vector<4x2x4x4x128xf32>
    %20 = vector.broadcast %13 : vector<4x1x4x4x128xf32> to vector<4x2x4x4x128xf32>
    %21 = arith.mulf %19, %20 : vector<4x2x4x4x128xf32>
    %cst_18 = arith.constant dense<0.000000e+00> : vector<4x2x4x128xf32>
    %22 = vector.multi_reduction <add>, %21, %cst_18 [2] : vector<4x2x4x4x128xf32> to vector<4x2x4x128xf32>
    %23 = vector.broadcast %5 : vector<4x2x4x1x128xf32> to vector<4x2x4x4x128xf32>
    %24 = vector.broadcast %14 : vector<4x1x4x4x128xf32> to vector<4x2x4x4x128xf32>
    %25 = arith.mulf %23, %24 : vector<4x2x4x4x128xf32>
    %cst_19 = arith.constant dense<0.000000e+00> : vector<4x2x4x128xf32>
    %26 = vector.multi_reduction <add>, %25, %cst_19 [2] : vector<4x2x4x4x128xf32> to vector<4x2x4x128xf32>
    %27 = arith.subf %18, %26 : vector<4x2x4x128xf32>
    %c0_20 = arith.constant 0 : index
    %c0_21 = arith.constant 0 : index
    %c0_22 = arith.constant 0 : index
    %c0_23 = arith.constant 0 : index
    %c0_24 = arith.constant 0 : index
    %28 = vector.load %arg3[%c0_20, %c0_21, %c0_22, %c0_23, %c0_24] : memref<2x4x2x4x128xf32, #tpu.memory_space<vmem>>, vector<1x4x2x4x128xf32>
    %29 = vector.shape_cast %28 : vector<1x4x2x4x128xf32> to vector<4x2x4x128xf32>
    %30 = vector.shape_cast %27 : vector<4x2x4x128xf32> to vector<1x4x2x4x128xf32>
    tpu.vector_store %arg3[%c0_20, %c0_21, %c0_22, %c0_23, %c0_24], %30 {strides = array<i32>} : memref<2x4x2x4x128xf32, #tpu.memory_space<vmem>>, vector<1x4x2x4x128xf32>,
    %31 = arith.addf %18, %22 : vector<4x2x4x128xf32>
    %c1_25 = arith.constant 1 : index
    %c0_26 = arith.constant 0 : index
    %c0_27 = arith.constant 0 : index
    %c0_28 = arith.constant 0 : index
    %c0_29 = arith.constant 0 : index
    %32 = vector.load %arg3[%c1_25, %c0_26, %c0_27, %c0_28, %c0_29] : memref<2x4x2x4x128xf32, #tpu.memory_space<vmem>>, vector<1x4x2x4x128xf32>
    %33 = vector.shape_cast %32 : vector<1x4x2x4x128xf32> to vector<4x2x4x128xf32>
    %34 = vector.shape_cast %31 : vector<4x2x4x128xf32> to vector<1x4x2x4x128xf32>
    tpu.vector_store %arg3[%c1_25, %c0_26, %c0_27, %c0_28, %c0_29], %34 {strides = array<i32>} : memref<2x4x2x4x128xf32, #tpu.memory_space<vmem>>, vector<1x4x2x4x128xf32>,
    return
  }
  func.func @transform_0(%arg0: i32) -> (i32, i32, i32, i32, i32) {
    %c0_i32 = arith.constant 0 : i32
    %c0_i32_0 = arith.constant 0 : i32
    %c0_i32_1 = arith.constant 0 : i32
    %c0_i32_2 = arith.constant 0 : i32
    %c0_i32_3 = arith.constant 0 : i32
    return %c0_i32, %arg0, %c0_i32_0, %c0_i32_1, %c0_i32_2 : i32, i32, i32, i32, i32
  }
  func.func @transform_1(%arg0: i32) -> (i32, i32, i32, i32, i32) {
    %c0_i32 = arith.constant 0 : i32
    %c0_i32_0 = arith.constant 0 : i32
    %c0_i32_1 = arith.constant 0 : i32
    %c0_i32_2 = arith.constant 0 : i32
    %c0_i32_3 = arith.constant 0 : i32
    return %c0_i32, %arg0, %c0_i32_0, %c0_i32_1, %c0_i32_2 : i32, i32, i32, i32, i32
  }
  func.func @transform_2(%arg0: i32) -> (i32, i32, i32, i32, i32) {
    %c0_i32 = arith.constant 0 : i32
    %c0_i32_0 = arith.constant 0 : i32
    %c0_i32_1 = arith.constant 0 : i32
    %c0_i32_2 = arith.constant 0 : i32
    %c0_i32_3 = arith.constant 0 : i32
    return %c0_i32, %arg0, %c0_i32_0, %c0_i32_1, %c0_i32_2 : i32, i32, i32, i32, i32
  }
}

</mosaic_0001>

<llo_original>
// kernel: tpu_custom_call.1
$region0: #{tpu_custom_call.1}
  #allocation0 [shape = 'u32[]', space=smem, size = 0x4, offset = 0x4, fixed_abs, tag = 'smem constant byte address 0x4 - core index']
  #allocation1 [shape = 'u32[144,128]{1,0:T(1,128)}', space=vmem, size = 0x12000, scoped, tag = 'internal scratch']
  #allocation8 [shape = 's32[]', space=sflag, size = 0x4, offset = 0, fixed_abs, tag = 'sflag constant byte address 0x0 - dummy sync flag']
  #allocation10 [shape = 's32[]', space=sflag, size = 0x4, offset = 0, fixed_abs, tag = 'sflag constant byte address 0x0 - dummy sync flag']
  #allocation12 [shape = 's32[]', space=sflag, size = 0x4, offset = 0, fixed_abs, tag = 'sflag constant byte address 0x0 - dummy sync flag']
  %s0 = inlined_call_operand.hbm [shape: f32[2,8,2,4,128], index: 0, kind: input, shape index: {}]
  %s1 = inlined_call_operand.hbm [shape: f32[2,8,4,4,128], index: 1, kind: input, shape index: {}]
  %s2 = inlined_call_operand.hbm [shape: f32[2,8,2,4,128], index: 2, kind: output, shape index: {}]
  %s3 = sld [smem:[#allocation0]]
  $region49: #{tpu_custom_call.1} parent=0
    _
  %s5 = ssub.s32 1, %s3
  %s6 = scalar_select 0, %s5, %s3
  $region1: #{tpu_custom_call.1} parent=0
    #allocation2 [shape = 'u8[65536]{0}', space=vmem, size = 0x10000, scoped, tag = 'input window, operand 0']
    #allocation3 [shape = 's32[2]{0}', space=sflag, size = 0x8, scoped, tag = 'scoped memory for tpu_custom_call.1']
    #allocation4 [shape = 's32[2]{0}', space=sflag, size = 0x8, scoped, tag = 'scoped memory for tpu_custom_call.1']
    #allocation5 [shape = 'u8[131072]{0}', space=vmem, size = 0x20000, scoped, tag = 'input window, operand 1']
    #allocation6 [shape = 's32[2]{0}', space=sflag, size = 0x8, scoped, tag = 'scoped memory for tpu_custom_call.1']
    #allocation7 [shape = 'u8[65536]{0}', space=vmem, size = 0x10000, scoped, tag = 'output window, operand 0']
    %7 = vsyncpa [#allocation3], 0
    %s8 = scalar_lea.sflag [#allocation3], 1
    %9 = vsyncpa %s8, 0
    %10 = vsyncpa [#allocation6], 0
    %s11 = scalar_lea.sflag [#allocation6], 1
    %12 = vsyncpa %s11, 0
    %13 = vsyncpa [#allocation4], 0
    %s14 = scalar_lea.sflag [#allocation4], 1
    %15 = vsyncpa %s14, 0
    loop: start=0, step=1, limit=4
    $region2: #{tpu_custom_call.1} parent=1 // loop_pre_header
      _
    $region3: #{tpu_custom_call.1} parent=1 // loop_header
      %s17 = sphi 0, %s21
      %p18 = scmp.ge.s32.totalorder %s17, 4
      %s27 = sphi 0, %s29
      %s30 = sphi 0, %s27
      %s31 = sphi 0, %s30
      %s47 = sphi 0, %s31
      %s53 = sphi 0, %s55
      %s56 = sphi 0, %s53
      %s57 = sphi 0, %s56
      %s73 = sphi 0, %s57
      %s79 = sphi 0, %s81
      %s82 = sphi 0, %s79
      %s83 = sphi 0, %s82
      %s99 = sphi 0, %s83
    $region4: #{tpu_custom_call.1} parent=1 // loop_header_branch
      %20 = sbr.rel (%p18) target = $region8
    $region5: #{tpu_custom_call.1} parent=1 // loop_body
      %s22 = ssub.s32 %s17, 1
      %s23 = ssub.s32 %s17, 2
      %s24 = sadd.s32 %s17, 1
      %s25 = ssub.s32 %s17, %s24
      %p26 = scmp.eq.s32.totalorder %s25, 0
      %s28 = sadd.s32 %s27, 1
      %s29 = scalar_select %p26, %s27, %s28
      %p32 = pneg %p26
      %p33 = scmp.eq.s32.totalorder %s17, 1
      %p34 = por %p32, %p33
      %p35 = scmp.ne.s32.totalorder %s27, %s30
      %p36 = scmp.eq.s32.totalorder %s17, 0
      %p37 = por %p35, %p36
      %p38 = scmp.ne.s32.totalorder %s27, %s30
      %p39 = scmp.eq.s32.totalorder %s22, 1
      %p40 = por %p38, %p39
      %p41 = scmp.ne.s32.totalorder %s30, %s31
      %p42 = scmp.eq.s32.totalorder %s22, 0
      %p43 = por %p41, %p42
      %p44 = scmp.ne.s32.totalorder %s30, %s31
      %p45 = scmp.eq.s32.totalorder %s23, 1
      %p46 = por %p44, %p45
      %p48 = scmp.ne.s32.totalorder %s31, %s47
      %p49 = scmp.eq.s32.totalorder %s23, 0
      %p50 = por %p48, %p49
      %s51 = ssub.s32 %s17, %s24
      %p52 = scmp.eq.s32.totalorder %s51, 0
      %s54 = sadd.s32 %s53, 1
      %s55 = scalar_select %p52, %s53, %s54
      %p58 = pneg %p52
      %p59 = scmp.eq.s32.totalorder %s17, 1
      %p60 = por %p58, %p59
      %p61 = scmp.ne.s32.totalorder %s53, %s56
      %p62 = scmp.eq.s32.totalorder %s17, 0
      %p63 = por %p61, %p62
      %p64 = scmp.ne.s32.totalorder %s53, %s56
      %p65 = scmp.eq.s32.totalorder %s22, 1
      %p66 = por %p64, %p65
      %p67 = scmp.ne.s32.totalorder %s56, %s57
      %p68 = scmp.eq.s32.totalorder %s22, 0
      %p69 = por %p67, %p68
      %p70 = scmp.ne.s32.totalorder %s56, %s57
      %p71 = scmp.eq.s32.totalorder %s23, 1
      %p72 = por %p70, %p71
      %p74 = scmp.ne.s32.totalorder %s57, %s73
      %p75 = scmp.eq.s32.totalorder %s23, 0
      %p76 = por %p74, %p75
      %s77 = ssub.s32 %s17, %s24
      %p78 = scmp.eq.s32.totalorder %s77, 0
      %s80 = sadd.s32 %s79, 1
      %s81 = scalar_select %p78, %s79, %s80
      %p84 = pneg %p78
      %p85 = scmp.eq.s32.totalorder %s17, 1
      %p86 = por %p84, %p85
      %p87 = scmp.ne.s32.totalorder %s79, %s82
      %p88 = scmp.eq.s32.totalorder %s17, 0
      %p89 = por %p87, %p88
      %p90 = scmp.ne.s32.totalorder %s79, %s82
      %p91 = scmp.eq.s32.totalorder %s22, 1
      %p92 = por %p90, %p91
      %p93 = scmp.ne.s32.totalorder %s82, %s83
      %p94 = scmp.eq.s32.totalorder %s22, 0
      %p95 = por %p93, %p94
      %p96 = scmp.ne.s32.totalorder %s82, %s83
      %p97 = scmp.eq.s32.totalorder %s23, 1
      %p98 = por %p96, %p97
      %p100 = scmp.ne.s32.totalorder %s83, %s99
      %p101 = scmp.eq.s32.totalorder %s23, 0
      %p102 = por %p100, %p101
      %p103 = scmp.le.s32.totalorder 1, %s17
      %p104 = scmp.lt.s32.totalorder %s17, 3
      %p105 = pnand %p103, %p104
      %p106 = pneg %p105
      // Predicated region
      $region9: #{tpu_custom_call.1} parent=5 // pred_check
        _
      $region10: #{tpu_custom_call.1} parent=5 // pred_check_branch
        %108 = sbr.rel (%p105) target = $region12
      $region11: #{tpu_custom_call.1} parent=5 // pred_region
        %s109 = ssub.s32 %s17, 1
      $region12: #{tpu_custom_call.1} parent=5 // pred_fallthru
        _
      %p110 = scmp.lt.s32.totalorder %s17, 2
      // Predicated region
      $region13: #{tpu_custom_call.1} parent=5 // pred_check
        %p111 = pneg %p110
      $region14: #{tpu_custom_call.1} parent=5 // pred_check_branch
        %113 = sbr.rel (%p111) target = $region16
      $region15: #{tpu_custom_call.1} parent=5 // pred_region
        // Predicated region
        $region17: #{tpu_custom_call.1} parent=15 // pred_check
          %p114 = pneg %p37
        $region18: #{tpu_custom_call.1} parent=15 // pred_check_branch
          %116 = sbr.rel (%p114) target = $region20
        $region19: #{tpu_custom_call.1} parent=15 // pred_region
          #allocation9 [shape = 'u32[6]{0}', space=smem, size = 0x18, scoped, tag = 'DMA stride descriptor']
          %s117 = sand.u32 %s27, 1
          %s118 = scalar_lea.sflag [#allocation3], %s117
          %s119 = sand.u32 %s27, 1
          %s120 = smul.addr %s119, 64
          %s121 = scalar_lea.vmem [#allocation2], %s120
          %s122 = smul.u32 4, %s17
          %s124 = ssub.s32 1024, 1024
          %125 = vsyncadd %s118, %s124
          %s126 = smul.addr %s122, 2
          %s127 = smul.addr %s126, 64
          %s128 = scalar_lea.hbm %s0, %s127
          %s130 = sshll.u32 1, 14
          %s131 = sxor.u32 4294967295, %s130
          %s133 = sld [smem:[#allocation0]]
          %s134 = sadd.s32 2, %s133
          %s136 = sshll.u32 7, 26
          %s137 = sxor.u32 4294967295, %s136
          %s138 = sand.u32 0, %s137
          %s139 = sshll.u32 %s134, 26
          %s140 = sor.u32 %s138, %s139
          %s141 = sshll.u32 %s121, 4
          %s142 = int_to_ptr.vmem [resolvable:$true] %s141
          %148 = sst [smem:[#allocation9]] 1024
          %s149 = scalar_lea.smem [#allocation9], 1
          %150 = sst [smem:[%s149]] 512
          %s151 = scalar_lea.smem [#allocation9], 2
          %152 = sst [smem:[%s151]] 8
          %s153 = scalar_lea.smem [#allocation9], 3
          %154 = sst [smem:[%s153]] 64
          %s155 = scalar_lea.smem [#allocation9], 4
          %156 = sst [smem:[%s155]] 64
          %s157 = scalar_lea.smem [#allocation9], 5
          %158 = sst [smem:[%s157]] 4
          %160 = dma.general %s128, 1024, %s142, %s118, [#allocation8], [#allocation9], %s140, 0
        $region20: #{tpu_custom_call.1} parent=15 // pred_fallthru
          _
        // Predicated region
        $region21: #{tpu_custom_call.1} parent=15 // pred_check
          %p161 = pneg %p63
        $region22: #{tpu_custom_call.1} parent=15 // pred_check_branch
          %163 = sbr.rel (%p161) target = $region24
        $region23: #{tpu_custom_call.1} parent=15 // pred_region
          #allocation11 [shape = 'u32[6]{0}', space=smem, size = 0x18, scoped, tag = 'DMA stride descriptor']
          %s164 = sand.u32 %s53, 1
          %s165 = scalar_lea.sflag [#allocation6], %s164
          %s166 = sand.u32 %s53, 1
          %s167 = smul.addr %s166, 128
          %s168 = scalar_lea.vmem [#allocation5], %s167
          %s169 = smul.u32 4, %s17
          %s171 = ssub.s32 2048, 2048
          %172 = vsyncadd %s165, %s171
          %s173 = smul.addr %s169, 4
          %s174 = smul.addr %s173, 64
          %s175 = scalar_lea.hbm %s1, %s174
          %s177 = sshll.u32 1, 14
          %s178 = sxor.u32 4294967295, %s177
          %s180 = sld [smem:[#allocation0]]
          %s181 = sadd.s32 2, %s180
          %s183 = sshll.u32 7, 26
          %s184 = sxor.u32 4294967295, %s183
          %s185 = sand.u32 0, %s184
          %s186 = sshll.u32 %s181, 26
          %s187 = sor.u32 %s185, %s186
          %s188 = sshll.u32 %s168, 4
          %s189 = int_to_ptr.vmem [resolvable:$true] %s188
          %195 = sst [smem:[#allocation11]] 2048
          %s196 = scalar_lea.smem [#allocation11], 1
          %197 = sst [smem:[%s196]] 1024
          %s198 = scalar_lea.smem [#allocation11], 2
          %199 = sst [smem:[%s198]] 16
          %s200 = scalar_lea.smem [#allocation11], 3
          %201 = sst [smem:[%s200]] 64
          %s202 = scalar_lea.smem [#allocation11], 4
          %203 = sst [smem:[%s202]] 64
          %s204 = scalar_lea.smem [#allocation11], 5
          %205 = sst [smem:[%s204]] 4
          %207 = dma.general %s175, 2048, %s189, %s165, [#allocation10], [#allocation11], %s187, 0
        $region24: #{tpu_custom_call.1} parent=15 // pred_fallthru
          _
      $region16: #{tpu_custom_call.1} parent=5 // pred_fallthru
        _
      %p208 = scmp.le.s32.totalorder 1, %s17
      %p209 = scmp.lt.s32.totalorder %s17, 3
      %p210 = pnand %p208, %p209
      %p211 = pneg %p210
      // Predicated region
      $region25: #{tpu_custom_call.1} parent=5 // pred_check
        _
      $region26: #{tpu_custom_call.1} parent=5 // pred_check_branch
        %213 = sbr.rel (%p210) target = $region28
      $region27: #{tpu_custom_call.1} parent=5 // pred_region
        %s214 = ssub.s32 %s17, 1
        %s215 = sand.u32 %s30, 1
        %s216 = scalar_lea.sflag [#allocation3], %s215
        %s217 = sand.u32 %s30, 1
        %s218 = smul.addr %s217, 64
        %s219 = scalar_lea.vmem [#allocation2], %s218
        // Predicated region
        $region29: #{tpu_custom_call.1} parent=27 // pred_check
          %p220 = pneg %p43
        $region30: #{tpu_custom_call.1} parent=27 // pred_check_branch
          %222 = sbr.rel (%p220) target = $region32
        $region31: #{tpu_custom_call.1} parent=27 // pred_region
          %223 = dma.done %s216, 1024
        $region32: #{tpu_custom_call.1} parent=27 // pred_fallthru
          _
        %s224 = sand.u32 %s56, 1
        %s225 = scalar_lea.sflag [#allocation6], %s224
        %s226 = sand.u32 %s56, 1
        %s227 = smul.addr %s226, 128
        %s228 = scalar_lea.vmem [#allocation5], %s227
        // Predicated region
        $region33: #{tpu_custom_call.1} parent=27 // pred_check
          %p229 = pneg %p69
        $region34: #{tpu_custom_call.1} parent=27 // pred_check_branch
          %231 = sbr.rel (%p229) target = $region36
        $region35: #{tpu_custom_call.1} parent=27 // pred_region
          %232 = dma.done %s225, 2048
        $region36: #{tpu_custom_call.1} parent=27 // pred_fallthru
          _
        %s233 = sand.u32 %s30, 1
        %s234 = scalar_lea.sflag [#allocation3], %s233
        %s235 = sand.u32 %s30, 1
        %s236 = smul.addr %s235, 64
        %s237 = scalar_lea.vmem [#allocation2], %s236
        %p238 = pneg %p43
        %p239 = pneg %p40
        %s240 = sand.u32 %s56, 1
        %s241 = scalar_lea.sflag [#allocation6], %s240
        %s242 = sand.u32 %s56, 1
        %s243 = smul.addr %s242, 128
        %s244 = scalar_lea.vmem [#allocation5], %s243
        %p245 = pneg %p69
        %p246 = pneg %p66
        %p247 = pneg %p95
        %p248 = pneg %p92
        %s249 = sand.u32 %s82, 1
        %s250 = scalar_lea.sflag [#allocation4], %s249
        %s251 = sand.u32 %s82, 1
        %s252 = smul.addr %s251, 64
        %s253 = scalar_lea.vmem [#allocation7], %s252
        %s254 = smul.u32 4, %s22
        %s255 = smul.u32 4, %s22
        %s256 = smul.u32 4, %s22
        %v257 = vld [vmem:[%s219] sm:$0xf]
        %v258 = vld [vmem:[%s219 + $0x4] sm:$0xf]
        %v259 = vld [vmem:[%s219 + $0x8] sm:$0xf]
        %v260 = vld [vmem:[%s219 + $0xc] sm:$0xf]
        %v261 = vld [vmem:[%s219 + $0x10] sm:$0xf]
        %v262 = vld [vmem:[%s219 + $0x14] sm:$0xf]
        %v263 = vld [vmem:[%s219 + $0x18] sm:$0xf]
        %v264 = vld [vmem:[%s219 + $0x1c] sm:$0xf]
        %v274 = vunpack.c.l.s4 1966171168
        %v275 = vunpack.c.0.s8 %v274
        %v276 = vlaneseq
        %v277 = vshrl.u32 %v276, 7
        %v278 = vsub.s32 %v275, %v277
        %v279 = vrot.slane %v257, %v278
        %v280 = vcombine.high %v279, %v279
        %v282 = vunpack.c.l.s4 1966171168
        %v283 = vunpack.c.0.s8 %v282
        %v284 = vlaneseq
        %v285 = vshrl.u32 %v284, 7
        %v286 = vsub.s32 %v283, %v285
        %v287 = vrot.slane %v279, %v286
        %v289 = vunpack.c.l.s4 1966171168
        %v290 = vunpack.c.0.s8 %v289
        %v291 = vlaneseq
        %v292 = vshrl.u32 %v291, 7
        %v293 = vsub.s32 %v290, %v292
        %v294 = vrot.slane %v280, %v293
        %v295 = vcombine.high %v287, %v287
        %v296 = vcombine.high %v294, %v294
        %v298 = vunpack.c.l.s4 1966171168
        %v299 = vunpack.c.0.s8 %v298
        %v300 = vlaneseq
        %v301 = vshrl.u32 %v300, 7
        %v302 = vsub.s32 %v299, %v301
        %v303 = vrot.slane %v258, %v302
        %v304 = vcombine.high %v303, %v303
        %v306 = vunpack.c.l.s4 1966171168
        %v307 = vunpack.c.0.s8 %v306
        %v308 = vlaneseq
        %v309 = vshrl.u32 %v308, 7
        %v310 = vsub.s32 %v307, %v309
        %v311 = vrot.slane %v303, %v310
        %v313 = vunpack.c.l.s4 1966171168
        %v314 = vunpack.c.0.s8 %v313
        %v315 = vlaneseq
        %v316 = vshrl.u32 %v315, 7
        %v317 = vsub.s32 %v314, %v316
        %v318 = vrot.slane %v304, %v317
        %v319 = vcombine.high %v311, %v311
        %v320 = vcombine.high %v318, %v318
        %v322 = vunpack.c.l.s4 1966171168
        %v323 = vunpack.c.0.s8 %v322
        %v324 = vlaneseq
        %v325 = vshrl.u32 %v324, 7
        %v326 = vsub.s32 %v323, %v325
        %v327 = vrot.slane %v259, %v326
        %v328 = vcombine.high %v327, %v327
        %v330 = vunpack.c.l.s4 1966171168
        %v331 = vunpack.c.0.s8 %v330
        %v332 = vlaneseq
        %v333 = vshrl.u32 %v332, 7
        %v334 = vsub.s32 %v331, %v333
        %v335 = vrot.slane %v327, %v334
        %v337 = vunpack.c.l.s4 1966171168
        %v338 = vunpack.c.0.s8 %v337
        %v339 = vlaneseq
        %v340 = vshrl.u32 %v339, 7
        %v341 = vsub.s32 %v338, %v340
        %v342 = vrot.slane %v328, %v341
        %v343 = vcombine.high %v335, %v335
        %v344 = vcombine.high %v342, %v342
        %v346 = vunpack.c.l.s4 1966171168
        %v347 = vunpack.c.0.s8 %v346
        %v348 = vlaneseq
        %v349 = vshrl.u32 %v348, 7
        %v350 = vsub.s32 %v347, %v349
        %v351 = vrot.slane %v260, %v350
        %v352 = vcombine.high %v351, %v351
        %v354 = vunpack.c.l.s4 1966171168
        %v355 = vunpack.c.0.s8 %v354
        %v356 = vlaneseq
        %v357 = vshrl.u32 %v356, 7
        %v358 = vsub.s32 %v355, %v357
        %v359 = vrot.slane %v351, %v358
        %v361 = vunpack.c.l.s4 1966171168
        %v362 = vunpack.c.0.s8 %v361
        %v363 = vlaneseq
        %v364 = vshrl.u32 %v363, 7
        %v365 = vsub.s32 %v362, %v364
        %v366 = vrot.slane %v352, %v365
        %v367 = vcombine.high %v359, %v359
        %v368 = vcombine.high %v366, %v366
        %v370 = vunpack.c.l.s4 1966171168
        %v371 = vunpack.c.0.s8 %v370
        %v372 = vlaneseq
        %v373 = vshrl.u32 %v372, 7
        %v374 = vsub.s32 %v371, %v373
        %v375 = vrot.slane %v261, %v374
        %v376 = vcombine.high %v375, %v375
        %v378 = vunpack.c.l.s4 1966171168
        %v379 = vunpack.c.0.s8 %v378
        %v380 = vlaneseq
        %v381 = vshrl.u32 %v380, 7
        %v382 = vsub.s32 %v379, %v381
        %v383 = vrot.slane %v375, %v382
        %v385 = vunpack.c.l.s4 1966171168
        %v386 = vunpack.c.0.s8 %v385
        %v387 = vlaneseq
        %v388 = vshrl.u32 %v387, 7
        %v389 = vsub.s32 %v386, %v388
        %v390 = vrot.slane %v376, %v389
        %v391 = vcombine.high %v383, %v383
        %v392 = vcombine.high %v390, %v390
        %v394 = vunpack.c.l.s4 1966171168
        %v395 = vunpack.c.0.s8 %v394
        %v396 = vlaneseq
        %v397 = vshrl.u32 %v396, 7
        %v398 = vsub.s32 %v395, %v397
        %v399 = vrot.slane %v262, %v398
        %v400 = vcombine.high %v399, %v399
        %v402 = vunpack.c.l.s4 1966171168
        %v403 = vunpack.c.0.s8 %v402
        %v404 = vlaneseq
        %v405 = vshrl.u32 %v404, 7
        %v406 = vsub.s32 %v403, %v405
        %v407 = vrot.slane %v399, %v406
        %v409 = vunpack.c.l.s4 1966171168
        %v410 = vunpack.c.0.s8 %v409
        %v411 = vlaneseq
        %v412 = vshrl.u32 %v411, 7
        %v413 = vsub.s32 %v410, %v412
        %v414 = vrot.slane %v400, %v413
        %v415 = vcombine.high %v407, %v407
        %v416 = vcombine.high %v414, %v414
        %v418 = vunpack.c.l.s4 1966171168
        %v419 = vunpack.c.0.s8 %v418
        %v420 = vlaneseq
        %v421 = vshrl.u32 %v420, 7
        %v422 = vsub.s32 %v419, %v421
        %v423 = vrot.slane %v263, %v422
        %v424 = vcombine.high %v423, %v423
        %v426 = vunpack.c.l.s4 1966171168
        %v427 = vunpack.c.0.s8 %v426
        %v428 = vlaneseq
        %v429 = vshrl.u32 %v428, 7
        %v430 = vsub.s32 %v427, %v429
        %v431 = vrot.slane %v423, %v430
        %v433 = vunpack.c.l.s4 1966171168
        %v434 = vunpack.c.0.s8 %v433
        %v435 = vlaneseq
        %v436 = vshrl.u32 %v435, 7
        %v437 = vsub.s32 %v434, %v436
        %v438 = vrot.slane %v424, %v437
        %v439 = vcombine.high %v431, %v431
        %v440 = vcombine.high %v438, %v438
        %v442 = vunpack.c.l.s4 1966171168
        %v443 = vunpack.c.0.s8 %v442
        %v444 = vlaneseq
        %v445 = vshrl.u32 %v444, 7
        %v446 = vsub.s32 %v443, %v445
        %v447 = vrot.slane %v264, %v446
        %v448 = vcombine.high %v447, %v447
        %v450 = vunpack.c.l.s4 1966171168
        %v451 = vunpack.c.0.s8 %v450
        %v452 = vlaneseq
        %v453 = vshrl.u32 %v452, 7
        %v454 = vsub.s32 %v451, %v453
        %v455 = vrot.slane %v447, %v454
        %v457 = vunpack.c.l.s4 1966171168
        %v458 = vunpack.c.0.s8 %v457
        %v459 = vlaneseq
        %v460 = vshrl.u32 %v459, 7
        %v461 = vsub.s32 %v458, %v460
        %v462 = vrot.slane %v448, %v461
        %v463 = vcombine.high %v455, %v455
        %v464 = vcombine.high %v462, %v462
        %s497 = scalar_lea.vmem %s219, 32 [#allocation2]
        %v498 = vld [vmem:[%s497] sm:$0xf]
        %v499 = vld [vmem:[%s497 + $0x4] sm:$0xf]
        %v500 = vld [vmem:[%s497 + $0x8] sm:$0xf]
        %v501 = vld [vmem:[%s497 + $0xc] sm:$0xf]
        %v502 = vld [vmem:[%s497 + $0x10] sm:$0xf]
        %v503 = vld [vmem:[%s497 + $0x14] sm:$0xf]
        %v504 = vld [vmem:[%s497 + $0x18] sm:$0xf]
        %v505 = vld [vmem:[%s497 + $0x1c] sm:$0xf]
        %v515 = vunpack.c.l.s4 1966171168
        %v516 = vunpack.c.0.s8 %v515
        %v517 = vlaneseq
        %v518 = vshrl.u32 %v517, 7
        %v519 = vsub.s32 %v516, %v518
        %v520 = vrot.slane %v498, %v519
        %v521 = vcombine.high %v520, %v520
        %v523 = vunpack.c.l.s4 1966171168
        %v524 = vunpack.c.0.s8 %v523
        %v525 = vlaneseq
        %v526 = vshrl.u32 %v525, 7
        %v527 = vsub.s32 %v524, %v526
        %v528 = vrot.slane %v520, %v527
        %v530 = vunpack.c.l.s4 1966171168
        %v531 = vunpack.c.0.s8 %v530
        %v532 = vlaneseq
        %v533 = vshrl.u32 %v532, 7
        %v534 = vsub.s32 %v531, %v533
        %v535 = vrot.slane %v521, %v534
        %v536 = vcombine.high %v528, %v528
        %v537 = vcombine.high %v535, %v535
        %v539 = vunpack.c.l.s4 1966171168
        %v540 = vunpack.c.0.s8 %v539
        %v541 = vlaneseq
        %v542 = vshrl.u32 %v541, 7
        %v543 = vsub.s32 %v540, %v542
        %v544 = vrot.slane %v499, %v543
        %v545 = vcombine.high %v544, %v544
        %v547 = vunpack.c.l.s4 1966171168
        %v548 = vunpack.c.0.s8 %v547
        %v549 = vlaneseq
        %v550 = vshrl.u32 %v549, 7
        %v551 = vsub.s32 %v548, %v550
        %v552 = vrot.slane %v544, %v551
        %v554 = vunpack.c.l.s4 1966171168
        %v555 = vunpack.c.0.s8 %v554
        %v556 = vlaneseq
        %v557 = vshrl.u32 %v556, 7
        %v558 = vsub.s32 %v555, %v557
        %v559 = vrot.slane %v545, %v558
        %v560 = vcombine.high %v552, %v552
        %v561 = vcombine.high %v559, %v559
        %v563 = vunpack.c.l.s4 1966171168
        %v564 = vunpack.c.0.s8 %v563
        %v565 = vlaneseq
        %v566 = vshrl.u32 %v565, 7
        %v567 = vsub.s32 %v564, %v566
        %v568 = vrot.slane %v500, %v567
        %v569 = vcombine.high %v568, %v568
        %v571 = vunpack.c.l.s4 1966171168
        %v572 = vunpack.c.0.s8 %v571
        %v573 = vlaneseq
        %v574 = vshrl.u32 %v573, 7
        %v575 = vsub.s32 %v572, %v574
        %v576 = vrot.slane %v568, %v575
        %v578 = vunpack.c.l.s4 1966171168
        %v579 = vunpack.c.0.s8 %v578
        %v580 = vlaneseq
        %v581 = vshrl.u32 %v580, 7
        %v582 = vsub.s32 %v579, %v581
        %v583 = vrot.slane %v569, %v582
        %v584 = vcombine.high %v576, %v576
        %v585 = vcombine.high %v583, %v583
        %v587 = vunpack.c.l.s4 1966171168
        %v588 = vunpack.c.0.s8 %v587
        %v589 = vlaneseq
        %v590 = vshrl.u32 %v589, 7
        %v591 = vsub.s32 %v588, %v590
        %v592 = vrot.slane %v501, %v591
        %v593 = vcombine.high %v592, %v592
        %v595 = vunpack.c.l.s4 1966171168
        %v596 = vunpack.c.0.s8 %v595
        %v597 = vlaneseq
        %v598 = vshrl.u32 %v597, 7
        %v599 = vsub.s32 %v596, %v598
        %v600 = vrot.slane %v592, %v599
        %v602 = vunpack.c.l.s4 1966171168
        %v603 = vunpack.c.0.s8 %v602
        %v604 = vlaneseq
        %v605 = vshrl.u32 %v604, 7
        %v606 = vsub.s32 %v603, %v605
        %v607 = vrot.slane %v593, %v606
        %v608 = vcombine.high %v600, %v600
        %v609 = vcombine.high %v607, %v607
        %v611 = vunpack.c.l.s4 1966171168
        %v612 = vunpack.c.0.s8 %v611
        %v613 = vlaneseq
        %v614 = vshrl.u32 %v613, 7
        %v615 = vsub.s32 %v612, %v614
        %v616 = vrot.slane %v502, %v615
        %v617 = vcombine.high %v616, %v616
        %v619 = vunpack.c.l.s4 1966171168
        %v620 = vunpack.c.0.s8 %v619
        %v621 = vlaneseq
        %v622 = vshrl.u32 %v621, 7
        %v623 = vsub.s32 %v620, %v622
        %v624 = vrot.slane %v616, %v623
        %v626 = vunpack.c.l.s4 1966171168
        %v627 = vunpack.c.0.s8 %v626
        %v628 = vlaneseq
        %v629 = vshrl.u32 %v628, 7
        %v630 = vsub.s32 %v627, %v629
        %v631 = vrot.slane %v617, %v630
        %v632 = vcombine.high %v624, %v624
        %v633 = vcombine.high %v631, %v631
        %v635 = vunpack.c.l.s4 1966171168
        %v636 = vunpack.c.0.s8 %v635
        %v637 = vlaneseq
        %v638 = vshrl.u32 %v637, 7
        %v639 = vsub.s32 %v636, %v638
        %v640 = vrot.slane %v503, %v639
        %v641 = vcombine.high %v640, %v640
        %v643 = vunpack.c.l.s4 1966171168
        %v644 = vunpack.c.0.s8 %v643
        %v645 = vlaneseq
        %v646 = vshrl.u32 %v645, 7
        %v647 = vsub.s32 %v644, %v646
        %v648 = vrot.slane %v640, %v647
        %v650 = vunpack.c.l.s4 1966171168
        %v651 = vunpack.c.0.s8 %v650
        %v652 = vlaneseq
        %v653 = vshrl.u32 %v652, 7
        %v654 = vsub.s32 %v651, %v653
        %v655 = vrot.slane %v641, %v654
        %v656 = vcombine.high %v648, %v648
        %v657 = vcombine.high %v655, %v655
        %v659 = vunpack.c.l.s4 1966171168
        %v660 = vunpack.c.0.s8 %v659
        %v661 = vlaneseq
        %v662 = vshrl.u32 %v661, 7
        %v663 = vsub.s32 %v660, %v662
        %v664 = vrot.slane %v504, %v663
        %v665 = vcombine.high %v664, %v664
        %v667 = vunpack.c.l.s4 1966171168
        %v668 = vunpack.c.0.s8 %v667
        %v669 = vlaneseq
        %v670 = vshrl.u32 %v669, 7
        %v671 = vsub.s32 %v668, %v670
        %v672 = vrot.slane %v664, %v671
        %v674 = vunpack.c.l.s4 1966171168
        %v675 = vunpack.c.0.s8 %v674
        %v676 = vlaneseq
        %v677 = vshrl.u32 %v676, 7
        %v678 = vsub.s32 %v675, %v677
        %v679 = vrot.slane %v665, %v678
        %v680 = vcombine.high %v672, %v672
        %v681 = vcombine.high %v679, %v679
        %v683 = vunpack.c.l.s4 1966171168
        %v684 = vunpack.c.0.s8 %v683
        %v685 = vlaneseq
        %v686 = vshrl.u32 %v685, 7
        %v687 = vsub.s32 %v684, %v686
        %v688 = vrot.slane %v505, %v687
        %v689 = vcombine.high %v688, %v688
        %v691 = vunpack.c.l.s4 1966171168
        %v692 = vunpack.c.0.s8 %v691
        %v693 = vlaneseq
        %v694 = vshrl.u32 %v693, 7
        %v695 = vsub.s32 %v692, %v694
        %v696 = vrot.slane %v688, %v695
        %v698 = vunpack.c.l.s4 1966171168
        %v699 = vunpack.c.0.s8 %v698
        %v700 = vlaneseq
        %v701 = vshrl.u32 %v700, 7
        %v702 = vsub.s32 %v699, %v701
        %v703 = vrot.slane %v689, %v702
        %v704 = vcombine.high %v696, %v696
        %v705 = vcombine.high %v703, %v703
        %v738 = vld [vmem:[%s228] sm:$0xf]
        %v739 = vld [vmem:[%s228 + $0x4] sm:$0xf]
        %v740 = vld [vmem:[%s228 + $0x8] sm:$0xf]
        %v741 = vld [vmem:[%s228 + $0xc] sm:$0xf]
        %v742 = vld [vmem:[%s228 + $0x10] sm:$0xf]
        %v743 = vld [vmem:[%s228 + $0x14] sm:$0xf]
        %v744 = vld [vmem:[%s228 + $0x18] sm:$0xf]
        %v745 = vld [vmem:[%s228 + $0x1c] sm:$0xf]
        %v746 = vld [vmem:[%s228 + $0x20] sm:$0xf]
        %v747 = vld [vmem:[%s228 + $0x24] sm:$0xf]
        %v748 = vld [vmem:[%s228 + $0x28] sm:$0xf]
        %v749 = vld [vmem:[%s228 + $0x2c] sm:$0xf]
        %v750 = vld [vmem:[%s228 + $0x30] sm:$0xf]
        %v751 = vld [vmem:[%s228 + $0x34] sm:$0xf]
        %v752 = vld [vmem:[%s228 + $0x38] sm:$0xf]
        %v753 = vld [vmem:[%s228 + $0x3c] sm:$0xf]
        %s754 = scalar_lea.vmem %s228, 64 [#allocation5]
        %v755 = vld [vmem:[%s754] sm:$0xf]
        %v756 = vld [vmem:[%s754 + $0x4] sm:$0xf]
        %v757 = vld [vmem:[%s754 + $0x8] sm:$0xf]
        %v758 = vld [vmem:[%s754 + $0xc] sm:$0xf]
        %v759 = vld [vmem:[%s754 + $0x10] sm:$0xf]
        %v760 = vld [vmem:[%s754 + $0x14] sm:$0xf]
        %v761 = vld [vmem:[%s754 + $0x18] sm:$0xf]
        %v762 = vld [vmem:[%s754 + $0x1c] sm:$0xf]
        %v763 = vld [vmem:[%s754 + $0x20] sm:$0xf]
        %v764 = vld [vmem:[%s754 + $0x24] sm:$0xf]
        %v765 = vld [vmem:[%s754 + $0x28] sm:$0xf]
        %v766 = vld [vmem:[%s754 + $0x2c] sm:$0xf]
        %v767 = vld [vmem:[%s754 + $0x30] sm:$0xf]
        %v768 = vld [vmem:[%s754 + $0x34] sm:$0xf]
        %v769 = vld [vmem:[%s754 + $0x38] sm:$0xf]
        %v770 = vld [vmem:[%s754 + $0x3c] sm:$0xf]
        %v771 = vadd.f32 %v287, %v528
        %v772 = vadd.f32 %v294, %v535
        %v773 = vadd.f32 %v295, %v536
        %v774 = vadd.f32 %v296, %v537
        %v775 = vadd.f32 %v311, %v552
        %v776 = vadd.f32 %v318, %v559
        %v777 = vadd.f32 %v319, %v560
        %v778 = vadd.f32 %v320, %v561
        %v779 = vadd.f32 %v335, %v576
        %v780 = vadd.f32 %v342, %v583
        %v781 = vadd.f32 %v343, %v584
        %v782 = vadd.f32 %v344, %v585
        %v783 = vadd.f32 %v359, %v600
        %v784 = vadd.f32 %v366, %v607
        %v785 = vadd.f32 %v367, %v608
        %v786 = vadd.f32 %v368, %v609
        %v787 = vadd.f32 %v383, %v624
        %v788 = vadd.f32 %v390, %v631
        %v789 = vadd.f32 %v391, %v632
        %v790 = vadd.f32 %v392, %v633
        %v791 = vadd.f32 %v407, %v648
        %v792 = vadd.f32 %v414, %v655
        %v793 = vadd.f32 %v415, %v656
        %v794 = vadd.f32 %v416, %v657
        %v795 = vadd.f32 %v431, %v672
        %v796 = vadd.f32 %v438, %v679
        %v797 = vadd.f32 %v439, %v680
        %v798 = vadd.f32 %v440, %v681
        %v799 = vadd.f32 %v455, %v696
        %v800 = vadd.f32 %v462, %v703
        %v801 = vadd.f32 %v463, %v704
        %v802 = vadd.f32 %v464, %v705
        %v803 = vsub.f32 %v755, %v738
        %v804 = vsub.f32 %v756, %v739
        %v805 = vsub.f32 %v757, %v740
        %v806 = vsub.f32 %v758, %v741
        %v807 = vsub.f32 %v759, %v742
        %v808 = vsub.f32 %v760, %v743
        %v809 = vsub.f32 %v761, %v744
        %v810 = vsub.f32 %v762, %v745
        %v811 = vsub.f32 %v763, %v746
        %v812 = vsub.f32 %v764, %v747
        %v813 = vsub.f32 %v765, %v748
        %v814 = vsub.f32 %v766, %v749
        %v815 = vsub.f32 %v767, %v750
        %v816 = vsub.f32 %v768, %v751
        %v817 = vsub.f32 %v769, %v752
        %v818 = vsub.f32 %v770, %v753
        %v819 = vadd.f32 %v738, %v755
        %v820 = vadd.f32 %v739, %v756
        %v821 = vadd.f32 %v740, %v757
        %v822 = vadd.f32 %v741, %v758
        %v823 = vadd.f32 %v742, %v759
        %v824 = vadd.f32 %v743, %v760
        %v825 = vadd.f32 %v744, %v761
        %v826 = vadd.f32 %v745, %v762
        %v827 = vadd.f32 %v746, %v763
        %v828 = vadd.f32 %v747, %v764
        %v829 = vadd.f32 %v748, %v765
        %v830 = vadd.f32 %v749, %v766
        %v831 = vadd.f32 %v750, %v767
        %v832 = vadd.f32 %v751, %v768
        %v833 = vadd.f32 %v752, %v769
        %v834 = vadd.f32 %v753, %v770
        %v867 = vlaneseq
        %v868 = vshrl.u32 %v867, 7
        %v869 = vsub.s32 0, %v868
        %v870 = vrot.slane %v771, %v869
        %v871 = vlaneseq
        %v872 = vshrl.u32 %v871, 7
        %v873 = vsub.s32 0, %v872
        %v874 = vrot.slane %v772, %v873
        %v875 = vlaneseq
        %v876 = vshrl.u32 %v875, 7
        %v877 = vsub.s32 0, %v876
        %v878 = vrot.slane %v773, %v877
        %v879 = vlaneseq
        %v880 = vshrl.u32 %v879, 7
        %v881 = vsub.s32 0, %v880
        %v882 = vrot.slane %v774, %v881
        %v883 = vlaneseq
        %v884 = vshrl.u32 %v883, 7
        %v885 = vsub.s32 0, %v884
        %v886 = vrot.slane %v775, %v885
        %v887 = vlaneseq
        %v888 = vshrl.u32 %v887, 7
        %v889 = vsub.s32 0, %v888
        %v890 = vrot.slane %v776, %v889
        %v891 = vlaneseq
        %v892 = vshrl.u32 %v891, 7
        %v893 = vsub.s32 0, %v892
        %v894 = vrot.slane %v777, %v893
        %v895 = vlaneseq
        %v896 = vshrl.u32 %v895, 7
        %v897 = vsub.s32 0, %v896
        %v898 = vrot.slane %v778, %v897
        %v899 = vlaneseq
        %v900 = vshrl.u32 %v899, 7
        %v901 = vsub.s32 0, %v900
        %v902 = vrot.slane %v779, %v901
        %v903 = vlaneseq
        %v904 = vshrl.u32 %v903, 7
        %v905 = vsub.s32 0, %v904
        %v906 = vrot.slane %v780, %v905
        %v907 = vlaneseq
        %v908 = vshrl.u32 %v907, 7
        %v909 = vsub.s32 0, %v908
        %v910 = vrot.slane %v781, %v909
        %v911 = vlaneseq
        %v912 = vshrl.u32 %v911, 7
        %v913 = vsub.s32 0, %v912
        %v914 = vrot.slane %v782, %v913
        %v915 = vlaneseq
        %v916 = vshrl.u32 %v915, 7
        %v917 = vsub.s32 0, %v916
        %v918 = vrot.slane %v783, %v917
        %v919 = vlaneseq
        %v920 = vshrl.u32 %v919, 7
        %v921 = vsub.s32 0, %v920
        %v922 = vrot.slane %v784, %v921
        %v923 = vlaneseq
        %v924 = vshrl.u32 %v923, 7
        %v925 = vsub.s32 0, %v924
        %v926 = vrot.slane %v785, %v925
        %v927 = vlaneseq
        %v928 = vshrl.u32 %v927, 7
        %v929 = vsub.s32 0, %v928
        %v930 = vrot.slane %v786, %v929
        %v931 = vlaneseq
        %v932 = vshrl.u32 %v931, 7
        %v933 = vsub.s32 0, %v932
        %v934 = vrot.slane %v787, %v933
        %v935 = vlaneseq
        %v936 = vshrl.u32 %v935, 7
        %v937 = vsub.s32 0, %v936
        %v938 = vrot.slane %v788, %v937
        %v939 = vlaneseq
        %v940 = vshrl.u32 %v939, 7
        %v941 = vsub.s32 0, %v940
        %v942 = vrot.slane %v789, %v941
        %v943 = vlaneseq
        %v944 = vshrl.u32 %v943, 7
        %v945 = vsub.s32 0, %v944
        %v946 = vrot.slane %v790, %v945
        %v947 = vlaneseq
        %v948 = vshrl.u32 %v947, 7
        %v949 = vsub.s32 0, %v948
        %v950 = vrot.slane %v791, %v949
        %v951 = vlaneseq
        %v952 = vshrl.u32 %v951, 7
        %v953 = vsub.s32 0, %v952
        %v954 = vrot.slane %v792, %v953
        %v955 = vlaneseq
        %v956 = vshrl.u32 %v955, 7
        %v957 = vsub.s32 0, %v956
        %v958 = vrot.slane %v793, %v957
        %v959 = vlaneseq
        %v960 = vshrl.u32 %v959, 7
        %v961 = vsub.s32 0, %v960
        %v962 = vrot.slane %v794, %v961
        %v963 = vlaneseq
        %v964 = vshrl.u32 %v963, 7
        %v965 = vsub.s32 0, %v964
        %v966 = vrot.slane %v795, %v965
        %v967 = vlaneseq
        %v968 = vshrl.u32 %v967, 7
        %v969 = vsub.s32 0, %v968
        %v970 = vrot.slane %v796, %v969
        %v971 = vlaneseq
        %v972 = vshrl.u32 %v971, 7
        %v973 = vsub.s32 0, %v972
        %v974 = vrot.slane %v797, %v973
        %v975 = vlaneseq
        %v976 = vshrl.u32 %v975, 7
        %v977 = vsub.s32 0, %v976
        %v978 = vrot.slane %v798, %v977
        %v979 = vlaneseq
        %v980 = vshrl.u32 %v979, 7
        %v981 = vsub.s32 0, %v980
        %v982 = vrot.slane %v799, %v981
        %v983 = vlaneseq
        %v984 = vshrl.u32 %v983, 7
        %v985 = vsub.s32 0, %v984
        %v986 = vrot.slane %v800, %v985
        %v987 = vlaneseq
        %v988 = vshrl.u32 %v987, 7
        %v989 = vsub.s32 0, %v988
        %v990 = vrot.slane %v801, %v989
        %v991 = vlaneseq
        %v992 = vshrl.u32 %v991, 7
        %v993 = vsub.s32 0, %v992
        %v994 = vrot.slane %v802, %v993
        %v1027 = vmul.f32 %v738, %v870
        %v1028 = vmul.f32 %v739, %v874
        %v1029 = vmul.f32 %v740, %v878
        %v1030 = vmul.f32 %v741, %v882
        %v1031 = vmul.f32 %v738, %v886
        %v1032 = vmul.f32 %v739, %v890
        %v1033 = vmul.f32 %v740, %v894
        %v1034 = vmul.f32 %v741, %v898
        %v1035 = vmul.f32 %v742, %v902
        %v1036 = vmul.f32 %v743, %v906
        %v1037 = vmul.f32 %v744, %v910
        %v1038 = vmul.f32 %v745, %v914
        %v1039 = vmul.f32 %v742, %v918
        %v1040 = vmul.f32 %v743, %v922
        %v1041 = vmul.f32 %v744, %v926
        %v1042 = vmul.f32 %v745, %v930
        %v1043 = vmul.f32 %v746, %v934
        %v1044 = vmul.f32 %v747, %v938
        %v1045 = vmul.f32 %v748, %v942
        %v1046 = vmul.f32 %v749, %v946
        %v1047 = vmul.f32 %v746, %v950
        %v1048 = vmul.f32 %v747, %v954
        %v1049 = vmul.f32 %v748, %v958
        %v1050 = vmul.f32 %v749, %v962
        %v1051 = vmul.f32 %v750, %v966
        %v1052 = vmul.f32 %v751, %v970
        %v1053 = vmul.f32 %v752, %v974
        %v1054 = vmul.f32 %v753, %v978
        %v1055 = vmul.f32 %v750, %v982
        %v1056 = vmul.f32 %v751, %v986
        %v1057 = vmul.f32 %v752, %v990
        %v1058 = vmul.f32 %v753, %v994
        %vm1059 = vcmask 1043456
        %v1060 = vsel %vm1059, %v1027, 0.0
        %v1061 = vsel %vm1059, %v1028, 0.0
        %v1062 = vadd.f32 %v1060, %v1061
        %v1063 = vsel %vm1059, %v1029, 0.0
        %v1064 = vadd.f32 %v1062, %v1063
        %v1065 = vsel %vm1059, %v1030, 0.0
        %v1066 = vadd.f32 %v1064, %v1065
        %v1067 = vsel %vm1059, %v1031, 0.0
        %v1068 = vsel %vm1059, %v1032, 0.0
        %v1069 = vadd.f32 %v1067, %v1068
        %v1070 = vsel %vm1059, %v1033, 0.0
        %v1071 = vadd.f32 %v1069, %v1070
        %v1072 = vsel %vm1059, %v1034, 0.0
        %v1073 = vadd.f32 %v1071, %v1072
        %v1074 = vsel %vm1059, %v1035, 0.0
        %v1075 = vsel %vm1059, %v1036, 0.0
        %v1076 = vadd.f32 %v1074, %v1075
        %v1077 = vsel %vm1059, %v1037, 0.0
        %v1078 = vadd.f32 %v1076, %v1077
        %v1079 = vsel %vm1059, %v1038, 0.0
        %v1080 = vadd.f32 %v1078, %v1079
        %v1081 = vsel %vm1059, %v1039, 0.0
        %v1082 = vsel %vm1059, %v1040, 0.0
        %v1083 = vadd.f32 %v1081, %v1082
        %v1084 = vsel %vm1059, %v1041, 0.0
        %v1085 = vadd.f32 %v1083, %v1084
        %v1086 = vsel %vm1059, %v1042, 0.0
        %v1087 = vadd.f32 %v1085, %v1086
        %v1088 = vsel %vm1059, %v1043, 0.0
        %v1089 = vsel %vm1059, %v1044, 0.0
        %v1090 = vadd.f32 %v1088, %v1089
        %v1091 = vsel %vm1059, %v1045, 0.0
        %v1092 = vadd.f32 %v1090, %v1091
        %v1093 = vsel %vm1059, %v1046, 0.0
        %v1094 = vadd.f32 %v1092, %v1093
        %v1095 = vsel %vm1059, %v1047, 0.0
        %v1096 = vsel %vm1059, %v1048, 0.0
        %v1097 = vadd.f32 %v1095, %v1096
        %v1098 = vsel %vm1059, %v1049, 0.0
        %v1099 = vadd.f32 %v1097, %v1098
        %v1100 = vsel %vm1059, %v1050, 0.0
        %v1101 = vadd.f32 %v1099, %v1100
        %v1102 = vsel %vm1059, %v1051, 0.0
        %v1103 = vsel %vm1059, %v1052, 0.0
        %v1104 = vadd.f32 %v1102, %v1103
        %v1105 = vsel %vm1059, %v1053, 0.0
        %v1106 = vadd.f32 %v1104, %v1105
        %v1107 = vsel %vm1059, %v1054, 0.0
        %v1108 = vadd.f32 %v1106, %v1107
        %v1109 = vsel %vm1059, %v1055, 0.0
        %v1110 = vsel %vm1059, %v1056, 0.0
        %v1111 = vadd.f32 %v1109, %v1110
        %v1112 = vsel %vm1059, %v1057, 0.0
        %v1113 = vadd.f32 %v1111, %v1112
        %v1114 = vsel %vm1059, %v1058, 0.0
        %v1115 = vadd.f32 %v1113, %v1114
        %v1116 = vlaneseq
        %v1117 = vshrl.u32 %v1116, 7
        %v1118 = vsub.s32 0, %v1117
        %v1119 = vrot.slane %v287, %v1118
        %v1120 = vlaneseq
        %v1121 = vshrl.u32 %v1120, 7
        %v1122 = vsub.s32 0, %v1121
        %v1123 = vrot.slane %v294, %v1122
        %v1124 = vlaneseq
        %v1125 = vshrl.u32 %v1124, 7
        %v1126 = vsub.s32 0, %v1125
        %v1127 = vrot.slane %v295, %v1126
        %v1128 = vlaneseq
        %v1129 = vshrl.u32 %v1128, 7
        %v1130 = vsub.s32 0, %v1129
        %v1131 = vrot.slane %v296, %v1130
        %v1132 = vlaneseq
        %v1133 = vshrl.u32 %v1132, 7
        %v1134 = vsub.s32 0, %v1133
        %v1135 = vrot.slane %v311, %v1134
        %v1136 = vlaneseq
        %v1137 = vshrl.u32 %v1136, 7
        %v1138 = vsub.s32 0, %v1137
        %v1139 = vrot.slane %v318, %v1138
        %v1140 = vlaneseq
        %v1141 = vshrl.u32 %v1140, 7
        %v1142 = vsub.s32 0, %v1141
        %v1143 = vrot.slane %v319, %v1142
        %v1144 = vlaneseq
        %v1145 = vshrl.u32 %v1144, 7
        %v1146 = vsub.s32 0, %v1145
        %v1147 = vrot.slane %v320, %v1146
        %v1148 = vlaneseq
        %v1149 = vshrl.u32 %v1148, 7
        %v1150 = vsub.s32 0, %v1149
        %v1151 = vrot.slane %v335, %v1150
        %v1152 = vlaneseq
        %v1153 = vshrl.u32 %v1152, 7
        %v1154 = vsub.s32 0, %v1153
        %v1155 = vrot.slane %v342, %v1154
        %v1156 = vlaneseq
        %v1157 = vshrl.u32 %v1156, 7
        %v1158 = vsub.s32 0, %v1157
        %v1159 = vrot.slane %v343, %v1158
        %v1160 = vlaneseq
        %v1161 = vshrl.u32 %v1160, 7
        %v1162 = vsub.s32 0, %v1161
        %v1163 = vrot.slane %v344, %v1162
        %v1164 = vlaneseq
        %v1165 = vshrl.u32 %v1164, 7
        %v1166 = vsub.s32 0, %v1165
        %v1167 = vrot.slane %v359, %v1166
        %v1168 = vlaneseq
        %v1169 = vshrl.u32 %v1168, 7
        %v1170 = vsub.s32 0, %v1169
        %v1171 = vrot.slane %v366, %v1170
        %v1172 = vlaneseq
        %v1173 = vshrl.u32 %v1172, 7
        %v1174 = vsub.s32 0, %v1173
        %v1175 = vrot.slane %v367, %v1174
        %v1176 = vlaneseq
        %v1177 = vshrl.u32 %v1176, 7
        %v1178 = vsub.s32 0, %v1177
        %v1179 = vrot.slane %v368, %v1178
        %v1180 = vlaneseq
        %v1181 = vshrl.u32 %v1180, 7
        %v1182 = vsub.s32 0, %v1181
        %v1183 = vrot.slane %v383, %v1182
        %v1184 = vlaneseq
        %v1185 = vshrl.u32 %v1184, 7
        %v1186 = vsub.s32 0, %v1185
        %v1187 = vrot.slane %v390, %v1186
        %v1188 = vlaneseq
        %v1189 = vshrl.u32 %v1188, 7
        %v1190 = vsub.s32 0, %v1189
        %v1191 = vrot.slane %v391, %v1190
        %v1192 = vlaneseq
        %v1193 = vshrl.u32 %v1192, 7
        %v1194 = vsub.s32 0, %v1193
        %v1195 = vrot.slane %v392, %v1194
        %v1196 = vlaneseq
        %v1197 = vshrl.u32 %v1196, 7
        %v1198 = vsub.s32 0, %v1197
        %v1199 = vrot.slane %v407, %v1198
        %v1200 = vlaneseq
        %v1201 = vshrl.u32 %v1200, 7
        %v1202 = vsub.s32 0, %v1201
        %v1203 = vrot.slane %v414, %v1202
        %v1204 = vlaneseq
        %v1205 = vshrl.u32 %v1204, 7
        %v1206 = vsub.s32 0, %v1205
        %v1207 = vrot.slane %v415, %v1206
        %v1208 = vlaneseq
        %v1209 = vshrl.u32 %v1208, 7
        %v1210 = vsub.s32 0, %v1209
        %v1211 = vrot.slane %v416, %v1210
        %v1212 = vlaneseq
        %v1213 = vshrl.u32 %v1212, 7
        %v1214 = vsub.s32 0, %v1213
        %v1215 = vrot.slane %v431, %v1214
        %v1216 = vlaneseq
        %v1217 = vshrl.u32 %v1216, 7
        %v1218 = vsub.s32 0, %v1217
        %v1219 = vrot.slane %v438, %v1218
        %v1220 = vlaneseq
        %v1221 = vshrl.u32 %v1220, 7
        %v1222 = vsub.s32 0, %v1221
        %v1223 = vrot.slane %v439, %v1222
        %v1224 = vlaneseq
        %v1225 = vshrl.u32 %v1224, 7
        %v1226 = vsub.s32 0, %v1225
        %v1227 = vrot.slane %v440, %v1226
        %v1228 = vlaneseq
        %v1229 = vshrl.u32 %v1228, 7
        %v1230 = vsub.s32 0, %v1229
        %v1231 = vrot.slane %v455, %v1230
        %v1232 = vlaneseq
        %v1233 = vshrl.u32 %v1232, 7
        %v1234 = vsub.s32 0, %v1233
        %v1235 = vrot.slane %v462, %v1234
        %v1236 = vlaneseq
        %v1237 = vshrl.u32 %v1236, 7
        %v1238 = vsub.s32 0, %v1237
        %v1239 = vrot.slane %v463, %v1238
        %v1240 = vlaneseq
        %v1241 = vshrl.u32 %v1240, 7
        %v1242 = vsub.s32 0, %v1241
        %v1243 = vrot.slane %v464, %v1242
        %v1276 = vmul.f32 %v1119, %v803
        %v1277 = vmul.f32 %v1123, %v804
        %v1278 = vmul.f32 %v1127, %v805
        %v1279 = vmul.f32 %v1131, %v806
        %v1280 = vmul.f32 %v1135, %v803
        %v1281 = vmul.f32 %v1139, %v804
        %v1282 = vmul.f32 %v1143, %v805
        %v1283 = vmul.f32 %v1147, %v806
        %v1284 = vmul.f32 %v1151, %v807
        %v1285 = vmul.f32 %v1155, %v808
        %v1286 = vmul.f32 %v1159, %v809
        %v1287 = vmul.f32 %v1163, %v810
        %v1288 = vmul.f32 %v1167, %v807
        %v1289 = vmul.f32 %v1171, %v808
        %v1290 = vmul.f32 %v1175, %v809
        %v1291 = vmul.f32 %v1179, %v810
        %v1292 = vmul.f32 %v1183, %v811
        %v1293 = vmul.f32 %v1187, %v812
        %v1294 = vmul.f32 %v1191, %v813
        %v1295 = vmul.f32 %v1195, %v814
        %v1296 = vmul.f32 %v1199, %v811
        %v1297 = vmul.f32 %v1203, %v812
        %v1298 = vmul.f32 %v1207, %v813
        %v1299 = vmul.f32 %v1211, %v814
        %v1300 = vmul.f32 %v1215, %v815
        %v1301 = vmul.f32 %v1219, %v816
        %v1302 = vmul.f32 %v1223, %v817
        %v1303 = vmul.f32 %v1227, %v818
        %v1304 = vmul.f32 %v1231, %v815
        %v1305 = vmul.f32 %v1235, %v816
        %v1306 = vmul.f32 %v1239, %v817
        %v1307 = vmul.f32 %v1243, %v818
        %v1308 = vsel %vm1059, %v1276, 0.0
        %v1309 = vsel %vm1059, %v1277, 0.0
        %v1310 = vadd.f32 %v1308, %v1309
        %v1311 = vsel %vm1059, %v1278, 0.0
        %v1312 = vadd.f32 %v1310, %v1311
        %v1313 = vsel %vm1059, %v1279, 0.0
        %v1314 = vadd.f32 %v1312, %v1313
        %v1315 = vsel %vm1059, %v1280, 0.0
        %v1316 = vsel %vm1059, %v1281, 0.0
        %v1317 = vadd.f32 %v1315, %v1316
        %v1318 = vsel %vm1059, %v1282, 0.0
        %v1319 = vadd.f32 %v1317, %v1318
        %v1320 = vsel %vm1059, %v1283, 0.0
        %v1321 = vadd.f32 %v1319, %v1320
        %v1322 = vsel %vm1059, %v1284, 0.0
        %v1323 = vsel %vm1059, %v1285, 0.0
        %v1324 = vadd.f32 %v1322, %v1323
        %v1325 = vsel %vm1059, %v1286, 0.0
        %v1326 = vadd.f32 %v1324, %v1325
        %v1327 = vsel %vm1059, %v1287, 0.0
        %v1328 = vadd.f32 %v1326, %v1327
        %v1329 = vsel %vm1059, %v1288, 0.0
        %v1330 = vsel %vm1059, %v1289, 0.0
        %v1331 = vadd.f32 %v1329, %v1330
        %v1332 = vsel %vm1059, %v1290, 0.0
        %v1333 = vadd.f32 %v1331, %v1332
        %v1334 = vsel %vm1059, %v1291, 0.0
        %v1335 = vadd.f32 %v1333, %v1334
        %v1336 = vsel %vm1059, %v1292, 0.0
        %v1337 = vsel %vm1059, %v1293, 0.0
        %v1338 = vadd.f32 %v1336, %v1337
        %v1339 = vsel %vm1059, %v1294, 0.0
        %v1340 = vadd.f32 %v1338, %v1339
        %v1341 = vsel %vm1059, %v1295, 0.0
        %v1342 = vadd.f32 %v1340, %v1341
        %v1343 = vsel %vm1059, %v1296, 0.0
        %v1344 = vsel %vm1059, %v1297, 0.0
        %v1345 = vadd.f32 %v1343, %v1344
        %v1346 = vsel %vm1059, %v1298, 0.0
        %v1347 = vadd.f32 %v1345, %v1346
        %v1348 = vsel %vm1059, %v1299, 0.0
        %v1349 = vadd.f32 %v1347, %v1348
        %v1350 = vsel %vm1059, %v1300, 0.0
        %v1351 = vsel %vm1059, %v1301, 0.0
        %v1352 = vadd.f32 %v1350, %v1351
        %v1353 = vsel %vm1059, %v1302, 0.0
        %v1354 = vadd.f32 %v1352, %v1353
        %v1355 = vsel %vm1059, %v1303, 0.0
        %v1356 = vadd.f32 %v1354, %v1355
        %v1357 = vsel %vm1059, %v1304, 0.0
        %v1358 = vsel %vm1059, %v1305, 0.0
        %v1359 = vadd.f32 %v1357, %v1358
        %v1360 = vsel %vm1059, %v1306, 0.0
        %v1361 = vadd.f32 %v1359, %v1360
        %v1362 = vsel %vm1059, %v1307, 0.0
        %v1363 = vadd.f32 %v1361, %v1362
        %v1364 = vlaneseq
        %v1365 = vshrl.u32 %v1364, 7
        %v1366 = vsub.s32 0, %v1365
        %v1367 = vrot.slane %v528, %v1366
        %v1368 = vlaneseq
        %v1369 = vshrl.u32 %v1368, 7
        %v1370 = vsub.s32 0, %v1369
        %v1371 = vrot.slane %v535, %v1370
        %v1372 = vlaneseq
        %v1373 = vshrl.u32 %v1372, 7
        %v1374 = vsub.s32 0, %v1373
        %v1375 = vrot.slane %v536, %v1374
        %v1376 = vlaneseq
        %v1377 = vshrl.u32 %v1376, 7
        %v1378 = vsub.s32 0, %v1377
        %v1379 = vrot.slane %v537, %v1378
        %v1380 = vlaneseq
        %v1381 = vshrl.u32 %v1380, 7
        %v1382 = vsub.s32 0, %v1381
        %v1383 = vrot.slane %v552, %v1382
        %v1384 = vlaneseq
        %v1385 = vshrl.u32 %v1384, 7
        %v1386 = vsub.s32 0, %v1385
        %v1387 = vrot.slane %v559, %v1386
        %v1388 = vlaneseq
        %v1389 = vshrl.u32 %v1388, 7
        %v1390 = vsub.s32 0, %v1389
        %v1391 = vrot.slane %v560, %v1390
        %v1392 = vlaneseq
        %v1393 = vshrl.u32 %v1392, 7
        %v1394 = vsub.s32 0, %v1393
        %v1395 = vrot.slane %v561, %v1394
        %v1396 = vlaneseq
        %v1397 = vshrl.u32 %v1396, 7
        %v1398 = vsub.s32 0, %v1397
        %v1399 = vrot.slane %v576, %v1398
        %v1400 = vlaneseq
        %v1401 = vshrl.u32 %v1400, 7
        %v1402 = vsub.s32 0, %v1401
        %v1403 = vrot.slane %v583, %v1402
        %v1404 = vlaneseq
        %v1405 = vshrl.u32 %v1404, 7
        %v1406 = vsub.s32 0, %v1405
        %v1407 = vrot.slane %v584, %v1406
        %v1408 = vlaneseq
        %v1409 = vshrl.u32 %v1408, 7
        %v1410 = vsub.s32 0, %v1409
        %v1411 = vrot.slane %v585, %v1410
        %v1412 = vlaneseq
        %v1413 = vshrl.u32 %v1412, 7
        %v1414 = vsub.s32 0, %v1413
        %v1415 = vrot.slane %v600, %v1414
        %v1416 = vlaneseq
        %v1417 = vshrl.u32 %v1416, 7
        %v1418 = vsub.s32 0, %v1417
        %v1419 = vrot.slane %v607, %v1418
        %v1420 = vlaneseq
        %v1421 = vshrl.u32 %v1420, 7
        %v1422 = vsub.s32 0, %v1421
        %v1423 = vrot.slane %v608, %v1422
        %v1424 = vlaneseq
        %v1425 = vshrl.u32 %v1424, 7
        %v1426 = vsub.s32 0, %v1425
        %v1427 = vrot.slane %v609, %v1426
        %v1428 = vlaneseq
        %v1429 = vshrl.u32 %v1428, 7
        %v1430 = vsub.s32 0, %v1429
        %v1431 = vrot.slane %v624, %v1430
        %v1432 = vlaneseq
        %v1433 = vshrl.u32 %v1432, 7
        %v1434 = vsub.s32 0, %v1433
        %v1435 = vrot.slane %v631, %v1434
        %v1436 = vlaneseq
        %v1437 = vshrl.u32 %v1436, 7
        %v1438 = vsub.s32 0, %v1437
        %v1439 = vrot.slane %v632, %v1438
        %v1440 = vlaneseq
        %v1441 = vshrl.u32 %v1440, 7
        %v1442 = vsub.s32 0, %v1441
        %v1443 = vrot.slane %v633, %v1442
        %v1444 = vlaneseq
        %v1445 = vshrl.u32 %v1444, 7
        %v1446 = vsub.s32 0, %v1445
        %v1447 = vrot.slane %v648, %v1446
        %v1448 = vlaneseq
        %v1449 = vshrl.u32 %v1448, 7
        %v1450 = vsub.s32 0, %v1449
        %v1451 = vrot.slane %v655, %v1450
        %v1452 = vlaneseq
        %v1453 = vshrl.u32 %v1452, 7
        %v1454 = vsub.s32 0, %v1453
        %v1455 = vrot.slane %v656, %v1454
        %v1456 = vlaneseq
        %v1457 = vshrl.u32 %v1456, 7
        %v1458 = vsub.s32 0, %v1457
        %v1459 = vrot.slane %v657, %v1458
        %v1460 = vlaneseq
        %v1461 = vshrl.u32 %v1460, 7
        %v1462 = vsub.s32 0, %v1461
        %v1463 = vrot.slane %v672, %v1462
        %v1464 = vlaneseq
        %v1465 = vshrl.u32 %v1464, 7
        %v1466 = vsub.s32 0, %v1465
        %v1467 = vrot.slane %v679, %v1466
        %v1468 = vlaneseq
        %v1469 = vshrl.u32 %v1468, 7
        %v1470 = vsub.s32 0, %v1469
        %v1471 = vrot.slane %v680, %v1470
        %v1472 = vlaneseq
        %v1473 = vshrl.u32 %v1472, 7
        %v1474 = vsub.s32 0, %v1473
        %v1475 = vrot.slane %v681, %v1474
        %v1476 = vlaneseq
        %v1477 = vshrl.u32 %v1476, 7
        %v1478 = vsub.s32 0, %v1477
        %v1479 = vrot.slane %v696, %v1478
        %v1480 = vlaneseq
        %v1481 = vshrl.u32 %v1480, 7
        %v1482 = vsub.s32 0, %v1481
        %v1483 = vrot.slane %v703, %v1482
        %v1484 = vlaneseq
        %v1485 = vshrl.u32 %v1484, 7
        %v1486 = vsub.s32 0, %v1485
        %v1487 = vrot.slane %v704, %v1486
        %v1488 = vlaneseq
        %v1489 = vshrl.u32 %v1488, 7
        %v1490 = vsub.s32 0, %v1489
        %v1491 = vrot.slane %v705, %v1490
        %v1524 = vmul.f32 %v1367, %v819
        %v1525 = vmul.f32 %v1371, %v820
        %v1526 = vmul.f32 %v1375, %v821
        %v1527 = vmul.f32 %v1379, %v822
        %v1528 = vmul.f32 %v1383, %v819
        %v1529 = vmul.f32 %v1387, %v820
        %v1530 = vmul.f32 %v1391, %v821
        %v1531 = vmul.f32 %v1395, %v822
        %v1532 = vmul.f32 %v1399, %v823
        %v1533 = vmul.f32 %v1403, %v824
        %v1534 = vmul.f32 %v1407, %v825
        %v1535 = vmul.f32 %v1411, %v826
        %v1536 = vmul.f32 %v1415, %v823
        %v1537 = vmul.f32 %v1419, %v824
        %v1538 = vmul.f32 %v1423, %v825
        %v1539 = vmul.f32 %v1427, %v826
        %v1540 = vmul.f32 %v1431, %v827
        %v1541 = vmul.f32 %v1435, %v828
        %v1542 = vmul.f32 %v1439, %v829
        %v1543 = vmul.f32 %v1443, %v830
        %v1544 = vmul.f32 %v1447, %v827
        %v1545 = vmul.f32 %v1451, %v828
        %v1546 = vmul.f32 %v1455, %v829
        %v1547 = vmul.f32 %v1459, %v830
        %v1548 = vmul.f32 %v1463, %v831
        %v1549 = vmul.f32 %v1467, %v832
        %v1550 = vmul.f32 %v1471, %v833
        %v1551 = vmul.f32 %v1475, %v834
        %v1552 = vmul.f32 %v1479, %v831
        %v1553 = vmul.f32 %v1483, %v832
        %v1554 = vmul.f32 %v1487, %v833
        %v1555 = vmul.f32 %v1491, %v834
        %v1556 = vsel %vm1059, %v1524, 0.0
        %v1557 = vsel %vm1059, %v1525, 0.0
        %v1558 = vadd.f32 %v1556, %v1557
        %v1559 = vsel %vm1059, %v1526, 0.0
        %v1560 = vadd.f32 %v1558, %v1559
        %v1561 = vsel %vm1059, %v1527, 0.0
        %v1562 = vadd.f32 %v1560, %v1561
        %v1563 = vsel %vm1059, %v1528, 0.0
        %v1564 = vsel %vm1059, %v1529, 0.0
        %v1565 = vadd.f32 %v1563, %v1564
        %v1566 = vsel %vm1059, %v1530, 0.0
        %v1567 = vadd.f32 %v1565, %v1566
        %v1568 = vsel %vm1059, %v1531, 0.0
        %v1569 = vadd.f32 %v1567, %v1568
        %v1570 = vsel %vm1059, %v1532, 0.0
        %v1571 = vsel %vm1059, %v1533, 0.0
        %v1572 = vadd.f32 %v1570, %v1571
        %v1573 = vsel %vm1059, %v1534, 0.0
        %v1574 = vadd.f32 %v1572, %v1573
        %v1575 = vsel %vm1059, %v1535, 0.0
        %v1576 = vadd.f32 %v1574, %v1575
        %v1577 = vsel %vm1059, %v1536, 0.0
        %v1578 = vsel %vm1059, %v1537, 0.0
        %v1579 = vadd.f32 %v1577, %v1578
        %v1580 = vsel %vm1059, %v1538, 0.0
        %v1581 = vadd.f32 %v1579, %v1580
        %v1582 = vsel %vm1059, %v1539, 0.0
        %v1583 = vadd.f32 %v1581, %v1582
        %v1584 = vsel %vm1059, %v1540, 0.0
        %v1585 = vsel %vm1059, %v1541, 0.0
        %v1586 = vadd.f32 %v1584, %v1585
        %v1587 = vsel %vm1059, %v1542, 0.0
        %v1588 = vadd.f32 %v1586, %v1587
        %v1589 = vsel %vm1059, %v1543, 0.0
        %v1590 = vadd.f32 %v1588, %v1589
        %v1591 = vsel %vm1059, %v1544, 0.0
        %v1592 = vsel %vm1059, %v1545, 0.0
        %v1593 = vadd.f32 %v1591, %v1592
        %v1594 = vsel %vm1059, %v1546, 0.0
        %v1595 = vadd.f32 %v1593, %v1594
        %v1596 = vsel %vm1059, %v1547, 0.0
        %v1597 = vadd.f32 %v1595, %v1596
        %v1598 = vsel %vm1059, %v1548, 0.0
        %v1599 = vsel %vm1059, %v1549, 0.0
        %v1600 = vadd.f32 %v1598, %v1599
        %v1601 = vsel %vm1059, %v1550, 0.0
        %v1602 = vadd.f32 %v1600, %v1601
        %v1603 = vsel %vm1059, %v1551, 0.0
        %v1604 = vadd.f32 %v1602, %v1603
        %v1605 = vsel %vm1059, %v1552, 0.0
        %v1606 = vsel %vm1059, %v1553, 0.0
        %v1607 = vadd.f32 %v1605, %v1606
        %v1608 = vsel %vm1059, %v1554, 0.0
        %v1609 = vadd.f32 %v1607, %v1608
        %v1610 = vsel %vm1059, %v1555, 0.0
        %v1611 = vadd.f32 %v1609, %v1610
        %v1612 = vsub.f32 %v1066, %v1562
        %v1613 = vsub.f32 %v1073, %v1569
        %v1614 = vsub.f32 %v1080, %v1576
        %v1615 = vsub.f32 %v1087, %v1583
        %v1616 = vsub.f32 %v1094, %v1590
        %v1617 = vsub.f32 %v1101, %v1597
        %v1618 = vsub.f32 %v1108, %v1604
        %v1619 = vsub.f32 %v1115, %v1611
        %1620 = vst [vmem:[%s253] sm:$0xf] %v1612
        %1621 = vst [vmem:[%s253 + $0x4] sm:$0xf] %v1613
        %1622 = vst [vmem:[%s253 + $0x8] sm:$0xf] %v1614
        %1623 = vst [vmem:[%s253 + $0xc] sm:$0xf] %v1615
        %1624 = vst [vmem:[%s253 + $0x10] sm:$0xf] %v1616
        %1625 = vst [vmem:[%s253 + $0x14] sm:$0xf] %v1617
        %1626 = vst [vmem:[%s253 + $0x18] sm:$0xf] %v1618
        %1627 = vst [vmem:[%s253 + $0x1c] sm:$0xf] %v1619
        %v1628 = vadd.f32 %v1066, %v1314
        %v1629 = vadd.f32 %v1073, %v1321
        %v1630 = vadd.f32 %v1080, %v1328
        %v1631 = vadd.f32 %v1087, %v1335
        %v1632 = vadd.f32 %v1094, %v1342
        %v1633 = vadd.f32 %v1101, %v1349
        %v1634 = vadd.f32 %v1108, %v1356
        %v1635 = vadd.f32 %v1115, %v1363
        %s1636 = scalar_lea.vmem %s253, 32 [#allocation7]
        %1637 = vst [vmem:[%s1636] sm:$0xf] %v1628
        %1638 = vst [vmem:[%s1636 + $0x4] sm:$0xf] %v1629
        %1639 = vst [vmem:[%s1636 + $0x8] sm:$0xf] %v1630
        %1640 = vst [vmem:[%s1636 + $0xc] sm:$0xf] %v1631
        %1641 = vst [vmem:[%s1636 + $0x10] sm:$0xf] %v1632
        %1642 = vst [vmem:[%s1636 + $0x14] sm:$0xf] %v1633
        %1643 = vst [vmem:[%s1636 + $0x18] sm:$0xf] %v1634
        %1644 = vst [vmem:[%s1636 + $0x1c] sm:$0xf] %v1635
        %s1645 = sand.u32 %s82, 1
        %s1646 = scalar_lea.sflag [#allocation4], %s1645
        %s1647 = sand.u32 %s82, 1
        %s1648 = smul.addr %s1647, 64
        %s1649 = scalar_lea.vmem [#allocation7], %s1648
        // Predicated region
        $region37: #{tpu_custom_call.1} parent=27 // pred_check
          %p1650 = pneg %p92
        $region38: #{tpu_custom_call.1} parent=27 // pred_check_branch
          %1652 = sbr.rel (%p1650) target = $region40
        $region39: #{tpu_custom_call.1} parent=27 // pred_region
          #allocation13 [shape = 'u32[6]{0}', space=smem, size = 0x18, scoped, tag = 'DMA stride descriptor']
          %s1653 = smul.u32 4, %s22
          %s1655 = ssub.s32 1024, 1024
          %1656 = vsyncadd %s1646, %s1655
          %s1657 = smul.addr %s1653, 2
          %s1658 = smul.addr %s1657, 64
          %s1659 = scalar_lea.hbm %s2, %s1658
          %s1661 = sshll.u32 1, 14
          %s1662 = sxor.u32 4294967295, %s1661
          %s1665 = sshll.u32 7, 18
          %s1666 = sxor.u32 4294967295, %s1665
          %s1667 = sand.u32 0, %s1666
          %s1669 = sor.u32 %s1667, 0
          %s1671 = sshll.u32 3, 24
          %s1672 = sxor.u32 4294967295, %s1671
          %s1673 = sand.u32 %s1669, %s1672
          %s1675 = sor.u32 %s1673, 0
          %s1676 = sshll.u32 %s1649, 4
          %s1677 = int_to_ptr.vmem [resolvable:$true] %s1676
          %1683 = sst [smem:[#allocation13]] 512
          %s1684 = scalar_lea.smem [#allocation13], 1
          %1685 = sst [smem:[%s1684]] 1024
          %s1686 = scalar_lea.smem [#allocation13], 2
          %1687 = sst [smem:[%s1686]] 8
          %s1688 = scalar_lea.smem [#allocation13], 3
          %1689 = sst [smem:[%s1688]] 64
          %s1690 = scalar_lea.smem [#allocation13], 4
          %1691 = sst [smem:[%s1690]] 64
          %s1692 = scalar_lea.smem [#allocation13], 5
          %1693 = sst [smem:[%s1692]] 4
          %1695 = dma.general %s1677, 1024, %s1659, %s1646, [#allocation12], [#allocation13], %s1675, 0
        $region40: #{tpu_custom_call.1} parent=27 // pred_fallthru
          _
      $region28: #{tpu_custom_call.1} parent=5 // pred_fallthru
        _
      %p1696 = scmp.le.s32.totalorder 2, %s17
      // Predicated region
      $region41: #{tpu_custom_call.1} parent=5 // pred_check
        %p1697 = pneg %p1696
      $region42: #{tpu_custom_call.1} parent=5 // pred_check_branch
        %1699 = sbr.rel (%p1697) target = $region44
      $region43: #{tpu_custom_call.1} parent=5 // pred_region
        %s1700 = ssub.s32 %s17, 2
        // Predicated region
        $region45: #{tpu_custom_call.1} parent=43 // pred_check
          %p1701 = pneg %p98
        $region46: #{tpu_custom_call.1} parent=43 // pred_check_branch
          %1703 = sbr.rel (%p1701) target = $region48
        $region47: #{tpu_custom_call.1} parent=43 // pred_region
          %s1704 = sand.u32 %s83, 1
          %s1705 = scalar_lea.sflag [#allocation4], %s1704
          %s1706 = sand.u32 %s83, 1
          %s1707 = smul.addr %s1706, 64
          %s1708 = scalar_lea.vmem [#allocation7], %s1707
          %1709 = dma.done %s1705, 1024
        $region48: #{tpu_custom_call.1} parent=43 // pred_fallthru
          _
      $region44: #{tpu_custom_call.1} parent=5 // pred_fallthru
        _
    $region6: #{tpu_custom_call.1} parent=1 // loop_footer
      %s21 = sadd.s32 1, %s17
    $region7: #{tpu_custom_call.1} parent=1 // loop_footer_branch
      %16 = sbr.rel target = $region3
    $region8: #{tpu_custom_call.1} parent=1 // loop_exit
      _
    %1710 = vsyncpa [#allocation3], 1
    %s1711 = scalar_lea.sflag [#allocation3], 1
    %1712 = vsyncpa %s1711, 1
    %1713 = vsyncpa [#allocation6], 1
    %s1714 = scalar_lea.sflag [#allocation6], 1
    %1715 = vsyncpa %s1714, 1
    %1716 = vsyncpa [#allocation4], 1
    %s1717 = scalar_lea.sflag [#allocation4], 1
    %1718 = vsyncpa %s1717, 1

</llo_original>
